<compile_context>
chip_gen: v5e
topology: v5e:2x2
jax: 0.10.0
libtpu: 0.0.40
codegen_flags: <defaults>
</compile_context>

<pallas_src>
import math

import jax
import jax.numpy as jnp
from jax import lax
from jax.experimental import pallas as pl
from jax.experimental.pallas import tpu as pltpu


_LANEW = 512                      # lane width of the flattened slab (mult of 128)
_ACC_ROWS = 64                    # fixed accumulator rows (decoupled from tile rows)
_VMEM_LIMIT = 32 * 1024 * 1024    # safe on v5e/v6e (128 MiB phys) and v7x (64 MiB phys)

try:
    _DEVICE_KIND = jax.devices()[0].device_kind.lower()
except Exception:  # pragma: no cover
    _DEVICE_KIND = ""
# Per-generation max tile rows: v6e/v7x have fast HBM -> bigger tiles to amortize
# the ~0.35us grid-step overhead; v5e keeps 512 (slower HBM, tighter scoped VMEM
# on the 3-input weighted path).
_TR_MAX = 1024 if ("v6" in _DEVICE_KIND or "v7" in _DEVICE_KIND
                   or "trillium" in _DEVICE_KIND) else 512


def _round_up(x, m):
    return ((x + m - 1) // m) * m


def _cdiv(a, b):
    return -(-a // b)


def _tile_rows(r):
    """Full-dim block when the slab is small, else the per-gen max (mult of 64)."""
    return r if r <= _TR_MAX else _TR_MAX


def _acc_rows(tr):
    return _ACC_ROWS if (tr >= _ACC_ROWS and tr % _ACC_ROWS == 0) else tr


# ---------------------------------------------------------------------------
# Kernels
# ---------------------------------------------------------------------------

def _make_sum_kernel(r, tr, s, lanew, acc_rows, needs_mask):
    """Unweighted: stream-sum (gt-pred)^2/gt into a fixed-size VMEM accumulator."""
    chunks = tr // acc_rows

    def kernel(gt_ref, pred_ref, part_ref, acc_ref):
        si = pl.program_id(1)

        @pl.when(si == 0)
        def _():
            acc_ref[...] = jnp.zeros_like(acc_ref)

        def accumulate(row_ok):
            gt = gt_ref[...].astype(jnp.float32)
            pred = pred_ref[...].astype(jnp.float32)
            if row_ok is not None:
                gt = jnp.where(row_ok, gt, 1.0)       # masked rows contribute 0
                pred = jnp.where(row_ok, pred, 1.0)
            inv = pl.reciprocal(gt, approx=True)      # EUP slot (free vs VPU)
            inv = inv * (2.0 - gt * inv)              # one Newton-Raphson step
            diff = gt - pred
            contrib = diff * diff * inv
            if chunks > 1:                            # fold tile into fixed acc rows
                contrib = contrib.reshape(chunks, acc_rows, lanew).sum(axis=0)
            acc_ref[...] += contrib                   # pure VPU adds per step

        if needs_mask:
            row0 = (pl.program_id(0) * s + si) * tr   # logical (unclamped) row start

            @pl.when(row0 + tr > r)                   # only boundary blocks pay for masking
            def _():
                rows = row0 + lax.broadcasted_iota(jnp.int32, (tr, 1), 0)
                accumulate(rows < r)

            @pl.when(row0 + tr <= r)
            def _():
                accumulate(None)
        else:
            accumulate(None)

        @pl.when(si == pl.num_programs(1) - 1)
        def _():
            # single cross-sublane reduce at finalize; lanes stay dense (lanew).
            part_ref[...] = jnp.sum(acc_ref[...], axis=0, keepdims=True)

    return kernel


def _make_weighted_kernel(r, tr, s, p, lanew, acc_rows, needs_mask):
    """Weighted: per-sample numerator/denominator streaming accumulation."""
    chunks = tr // acc_rows

    def kernel(gt_ref, pred_ref, w_ref, num_ref, den_ref, num_acc, den_acc):
        si = pl.program_id(1)

        @pl.when(si == 0)
        def _():
            num_acc[...] = jnp.zeros_like(num_acc)
            den_acc[...] = jnp.zeros_like(den_acc)

        def accumulate(row_ok):
            gt = gt_ref[...].astype(jnp.float32)
            pred = pred_ref[...].astype(jnp.float32)
            w = w_ref[...].astype(jnp.float32)
            if row_ok is not None:
                gt = jnp.where(row_ok, gt, 1.0)       # keep num finite * 0 == 0
                pred = jnp.where(row_ok, pred, 1.0)
                w = jnp.where(row_ok, w, 0.0)
            inv = pl.reciprocal(gt, approx=True)
            inv = inv * (2.0 - gt * inv)              # Newton-Raphson refinement
            diff = gt - pred
            num = diff * diff * inv * w
            if chunks > 1:
                num = num.reshape(chunks, acc_rows, lanew).sum(axis=0)
                w = w.reshape(chunks, acc_rows, lanew).sum(axis=0)
            num_acc[...] += num
            den_acc[...] += w

        if needs_mask:
            half = (pl.program_id(0) % p) if p > 1 else 0
            row0 = (half * s + si) * tr

            @pl.when(row0 + tr > r)
            def _():
                rows = row0 + lax.broadcasted_iota(jnp.int32, (tr, 1), 0)
                accumulate(rows < r)

            @pl.when(row0 + tr <= r)
            def _():
                accumulate(None)
        else:
            accumulate(None)

        @pl.when(si == pl.num_programs(1) - 1)
        def _():
            num_ref[...] = jnp.sum(num_acc[...], axis=0, keepdims=True)
            den_ref[...] = jnp.sum(den_acc[...], axis=0, keepdims=True)

    return kernel


# ---------------------------------------------------------------------------
# Wrappers
# ---------------------------------------------------------------------------

def _sqrel_unweighted_impl(gt, pred):
    # All samples have equal element count, so mean-of-per-sample-means
    # == global mean over all B*N elements -> flatten into one lane-dense slab.
    total = math.prod(gt.shape)
    flat_gt = gt.reshape(-1)
    flat_pred = pred.reshape(-1)
    n_elem = total
    if total % _LANEW != 0:
        # TODO(synk): this pad is one extra HBM copy; only hit when the element
        # count is not a multiple of 512. Pad value 1.0 -> (1-1)^2/1 == 0.
        n_elem = _round_up(total, _LANEW)
        flat_gt = jnp.pad(flat_gt, (0, n_elem - total), constant_values=1.0)
        flat_pred = jnp.pad(flat_pred, (0, n_elem - total), constant_values=1.0)

    r = n_elem // _LANEW
    gt2 = flat_gt.reshape(r, _LANEW)       # contiguous reshape -> no copy under jit
    pred2 = flat_pred.reshape(r, _LANEW)

    tr = _tile_rows(r)
    n_blocks = _cdiv(r, tr)
    p = 2 if n_blocks >= 2 else 1          # keep v7x's 2nd TensorCore busy
    s = _cdiv(n_blocks, p)
    needs_mask = (p * s * tr) > r
    acc_rows = _acc_rows(tr)

    if p * s > n_blocks:                   # phantom block (odd n_blocks): clamp DMA,
        def in_map(pi, si):                # kernel masks it to zero contribution.
            return (jnp.minimum(pi * s + si, n_blocks - 1), 0)
    else:
        def in_map(pi, si):
            return (pi * s + si, 0)

    in_spec = pl.BlockSpec((tr, _LANEW), in_map)           # one contiguous HBM stripe
    out_spec = pl.BlockSpec((None, 1, _LANEW), lambda pi, si: (pi, 0, 0))

    partials = pl.pallas_call(
        _make_sum_kernel(r, tr, s, _LANEW, acc_rows, needs_mask),
        out_shape=jax.ShapeDtypeStruct((p, 1, _LANEW), jnp.float32),
        grid=(p, s),
        in_specs=[in_spec, in_spec],
        out_specs=out_spec,
        scratch_shapes=[pltpu.VMEM((acc_rows, _LANEW), jnp.float32)],
        compiler_params=pltpu.CompilerParams(
            dimension_semantics=("parallel", "arbitrary"),
            vmem_limit_bytes=_VMEM_LIMIT),
    )(gt2, pred2)

    return jnp.sum(partials) / jnp.float32(total)


def _sqrel_weighted_impl(gt, pred, weights):
    b = gt.shape[0]
    n = math.prod(gt.shape[1:])
    gt2 = gt.reshape(b, n)
    pred2 = pred.reshape(b, n)
    w2 = weights.reshape(b, n)
    n_elem = n
    if n % _LANEW != 0:
        # TODO(synk): pad copy only when the per-sample count isn't a multiple of
        # 512 (gt/pred -> 1.0 contributes 0; weight -> 0.0 leaves num/den alone).
        n_elem = _round_up(n, _LANEW)
        padc = ((0, 0), (0, n_elem - n))
        gt2 = jnp.pad(gt2, padc, constant_values=1.0)
        pred2 = jnp.pad(pred2, padc, constant_values=1.0)
        w2 = jnp.pad(w2, padc, constant_values=0.0)

    r = n_elem // _LANEW
    gt3 = gt2.reshape(b, r, _LANEW)
    pred3 = pred2.reshape(b, r, _LANEW)
    w3 = w2.reshape(b, r, _LANEW)

    tr = _tile_rows(r)
    n_blocks = _cdiv(r, tr)
    p = 2 if n_blocks >= 2 else 1          # row-half split so B=1/odd B still feeds 2 TCs
    s = _cdiv(n_blocks, p)
    needs_mask = (p * s * tr) > r
    acc_rows = _acc_rows(tr)

    if p == 1:
        def in_map(gi, si):
            return (gi, si, 0)
    elif p * s > n_blocks:
        def in_map(gi, si):
            return (gi // p, jnp.minimum((gi % p) * s + si, n_blocks - 1), 0)
    else:
        def in_map(gi, si):
            return (gi // p, (gi % p) * s + si, 0)

    in_spec = pl.BlockSpec((None, tr, _LANEW), in_map)
    out_spec = pl.BlockSpec((None, 1, _LANEW), lambda gi, si: (gi, 0, 0))

    num, den = pl.pallas_call(
        _make_weighted_kernel(r, tr, s, p, _LANEW, acc_rows, needs_mask),
        out_shape=(jax.ShapeDtypeStruct((b * p, 1, _LANEW), jnp.float32),
                   jax.ShapeDtypeStruct((b * p, 1, _LANEW), jnp.float32)),
        grid=(b * p, s),
        in_specs=[in_spec, in_spec, in_spec],
        out_specs=(out_spec, out_spec),
        scratch_shapes=[pltpu.VMEM((acc_rows, _LANEW), jnp.float32),
                        pltpu.VMEM((acc_rows, _LANEW), jnp.float32)],
        compiler_params=pltpu.CompilerParams(
            dimension_semantics=("parallel", "arbitrary"),
            vmem_limit_bytes=_VMEM_LIMIT),
    )(gt3, pred3, w3)

    num_b = jnp.sum(num.reshape(b, -1), axis=1)
    den_b = jnp.sum(den.reshape(b, -1), axis=1)
    return jnp.mean(num_b / den_b)


_sqrel_unweighted = jax.jit(_sqrel_unweighted_impl)
_sqrel_weighted = jax.jit(_sqrel_weighted_impl)


def sqrel(gt, pred, weights=None, mask=None):
    """gt/pred/(weights): [B, ...] (e.g. NCHW). Returns scalar f32.

    NOTE: like the reference, gt==0 is unguarded (produces inf/NaN)."""
    if mask is not None:
        # TODO(synk): boolean-mask gather (data-dependent shape) not supported.
        raise NotImplementedError("mask path not supported in Pallas kernel")
    if weights is None:
        return _sqrel_unweighted(gt, pred)
    return _sqrel_weighted(gt, pred, weights)


# ---------------------------------------------------------------------------
# Reference + test
# ---------------------------------------------------------------------------

def _reference(gt, pred, weights=None):
    gt = gt.astype(jnp.float32)
    pred = pred.astype(jnp.float32)
    sq = (gt - pred) ** 2 / gt
    red = tuple(range(1, gt.ndim))
    if weights is None:
        return jnp.mean(jnp.mean(sq, axis=red))
    w = weights.astype(jnp.float32)
    return jnp.mean(jnp.sum(sq * w, axis=red) / jnp.sum(w, axis=red))


def _check(shape, key):
    k1, k2, k3 = jax.random.split(key, 3)
    # keep gt strictly positive (depth-like ground truth) to avoid div-by-zero
    gt = jax.random.uniform(k1, shape, jnp.float32, minval=0.5, maxval=2.0)
    pred = gt + 0.1 * jax.random.normal(k2, shape, jnp.float32)
    weights = jax.random.uniform(k3, shape, jnp.float32, minval=0.1, maxval=1.0)

    out_u = jax.block_until_ready(sqrel(gt, pred))
    ref_u = _reference(gt, pred)
    assert jnp.allclose(out_u, ref_u, rtol=1e-4, atol=1e-6), (shape, out_u, ref_u)

    out_w = jax.block_until_ready(sqrel(gt, pred, weights))
    ref_w = _reference(gt, pred, weights)
    assert jnp.allclose(out_w, ref_w, rtol=1e-4, atol=1e-6), (shape, out_w, ref_w)


if __name__ == "__main__":
    key = jax.random.PRNGKey(0)
    ka, kb = jax.random.split(key)

    _check((2, 4, 16, 16), ka)   # size multiple of 512 -> zero-copy fast path
    _check((2, 3, 7, 11), kb)    # odd size -> pad fallback path

    print("KERNEL_OK")
</pallas_src>

<mosaic_0001>
module attributes {stable_mosaic.version = 11 : i64} {
  func.func @kernel(%arg0: i32, %arg1: i32, %arg2: memref<4x512xf32, #tpu.memory_space<vmem>>, %arg3: memref<4x512xf32, #tpu.memory_space<vmem>>, %arg4: memref<1x1x512xf32, #tpu.memory_space<vmem>>, %arg5: memref<4x512xf32, #tpu.memory_space<vmem>>) attributes {dimension_semantics = [#tpu.dimension_semantics<parallel>, #tpu.dimension_semantics<arbitrary>], iteration_bounds = array<i64: 1, 1>, scalar_prefetch = 0 : i64, scratch_operands = 1 : i64, tpu.core_type = #tpu.core_type<tc>, window_params = [{transform_indices = @transform_0, window_bounds = array<i64: 4, 512>}, {transform_indices = @transform_1, window_bounds = array<i64: 4, 512>}, {transform_indices = @transform_2, window_bounds = array<i64: 1, 1, 512>}]} {
    %c0_i32 = arith.constant 0 : i32
    %0 = arith.cmpi eq, %arg1, %c0_i32 : i32
    %1 = arith.extui %0 : i1 to i32
    %c0_i32_0 = arith.constant 0 : i32
    %2 = arith.cmpi ne, %1, %c0_i32_0 : i32
    scf.if %2 {
      %cst_10 = arith.constant 0.000000e+00 : f32
      %19 = vector.broadcast %cst_10 : f32 to vector<4x512xf32>
      %c0_11 = arith.constant 0 : index
      %c0_12 = arith.constant 0 : index
      %20 = vector.load %arg5[%c0_11, %c0_12] : memref<4x512xf32, #tpu.memory_space<vmem>>, vector<4x512xf32>
      tpu.vector_store %arg5[%c0_11, %c0_12], %19 {strides = array<i32>} : memref<4x512xf32, #tpu.memory_space<vmem>>, vector<4x512xf32>,
    } else {
    }
    %c0 = arith.constant 0 : index
    %c0_1 = arith.constant 0 : index
    %3 = vector.load %arg2[%c0, %c0_1] : memref<4x512xf32, #tpu.memory_space<vmem>>, vector<4x512xf32>
    %c0_2 = arith.constant 0 : index
    %c0_3 = arith.constant 0 : index
    %4 = vector.load %arg3[%c0_2, %c0_3] : memref<4x512xf32, #tpu.memory_space<vmem>>, vector<4x512xf32>
    %5 = tpu.reciprocal %3 {approx = true} : vector<4x512xf32> -> vector<4x512xf32>
    %6 = arith.mulf %3, %5 : vector<4x512xf32>
    %cst = arith.constant 2.000000e+00 : f32
    %7 = vector.broadcast %cst : f32 to vector<4x512xf32>
    %8 = arith.subf %7, %6 : vector<4x512xf32>
    %9 = arith.mulf %5, %8 : vector<4x512xf32>
    %10 = arith.subf %3, %4 : vector<4x512xf32>
    %11 = arith.mulf %10, %10 : vector<4x512xf32>
    %12 = arith.mulf %11, %9 : vector<4x512xf32>
    %c0_4 = arith.constant 0 : index
    %c0_5 = arith.constant 0 : index
    %13 = vector.load %arg5[%c0_4, %c0_5] : memref<4x512xf32, #tpu.memory_space<vmem>>, vector<4x512xf32>
    %14 = arith.addf %13, %12 : vector<4x512xf32>
    %c0_6 = arith.constant 0 : index
    %c0_7 = arith.constant 0 : index
    %15 = vector.load %arg5[%c0_6, %c0_7] : memref<4x512xf32, #tpu.memory_space<vmem>>, vector<4x512xf32>
    tpu.vector_store %arg5[%c0_6, %c0_7], %14 {strides = array<i32>} : memref<4x512xf32, #tpu.memory_space<vmem>>, vector<4x512xf32>,
    %c0_i32_8 = arith.constant 0 : i32
    %16 = arith.cmpi eq, %arg1, %c0_i32_8 : i32
    %17 = arith.extui %16 : i1 to i32
    %c0_i32_9 = arith.constant 0 : i32
    %18 = arith.cmpi ne, %17, %c0_i32_9 : i32
    scf.if %18 {
      %c0_10 = arith.constant 0 : index
      %c0_11 = arith.constant 0 : index
      %19 = vector.load %arg5[%c0_10, %c0_11] : memref<4x512xf32, #tpu.memory_space<vmem>>, vector<4x512xf32>
      %cst_12 = arith.constant dense<0.000000e+00> : vector<512xf32>
      %20 = vector.multi_reduction <add>, %19, %cst_12 [0] : vector<4x512xf32> to vector<512xf32>
      %21 = vector.shape_cast %20 : vector<512xf32> to vector<1x512xf32>
      %c0_13 = arith.constant 0 : index
      %c0_14 = arith.constant 0 : index
      %c0_15 = arith.constant 0 : index
      %22 = vector.load %arg4[%c0_13, %c0_14, %c0_15] : memref<1x1x512xf32, #tpu.memory_space<vmem>>, vector<1x1x512xf32>
      %23 = vector.shape_cast %22 : vector<1x1x512xf32> to vector<1x512xf32>
      %24 = vector.shape_cast %21 : vector<1x512xf32> to vector<1x1x512xf32>
      tpu.vector_store %arg4[%c0_13, %c0_14, %c0_15], %24 {strides = array<i32>} : memref<1x1x512xf32, #tpu.memory_space<vmem>>, vector<1x1x512xf32>,
    } else {
    }
    return
  }
  func.func @transform_0(%arg0: i32, %arg1: i32) -> (i32, i32) {
    %c1_i32 = arith.constant 1 : i32
    %0 = arith.muli %arg0, %c1_i32 : i32
    %1 = arith.addi %0, %arg1 : i32
    %c0_i32 = arith.constant 0 : i32
    %c0_i32_0 = arith.constant 0 : i32
    return %1, %c0_i32 : i32, i32
  }
  func.func @transform_1(%arg0: i32, %arg1: i32) -> (i32, i32) {
    %c1_i32 = arith.constant 1 : i32
    %0 = arith.muli %arg0, %c1_i32 : i32
    %1 = arith.addi %0, %arg1 : i32
    %c0_i32 = arith.constant 0 : i32
    %c0_i32_0 = arith.constant 0 : i32
    return %1, %c0_i32 : i32, i32
  }
  func.func @transform_2(%arg0: i32, %arg1: i32) -> (i32, i32, i32) {
    %c0_i32 = arith.constant 0 : i32
    %c0_i32_0 = arith.constant 0 : i32
    %c0_i32_1 = arith.constant 0 : i32
    return %arg0, %c0_i32, %c0_i32_0 : i32, i32, i32
  }
}

</mosaic_0001>

<llo_original>
// kernel: _sqrel_unweighted_impl.1
$region0: #{_sqrel_unweighted_impl.1}
  #allocation0 [shape = 'u32[]', space=smem, size = 0x4, offset = 0x4, fixed_abs, tag = 'smem constant byte address 0x4 - core index']
  #allocation1 [shape = 'u32[72,128]{1,0:T(1,128)}', space=vmem, size = 0x9000, scoped, tag = 'internal scratch']
  #allocation2 [shape = 'f32[4,512]{1,0:T(4,128)}', space=vmem, size = 0x2000, scoped, tag = 'scratch operand']
  %s0 = inlined_call_operand.vmem [shape: f32[4,512], index: 0, kind: input, shape index: {}]
  %s1 = inlined_call_operand.vmem [shape: f32[4,512], index: 1, kind: input, shape index: {}]
  %s2 = inlined_call_operand.vmem [shape: f32[1,1,512], index: 2, kind: output, shape index: {}]
  %s3 = sld [smem:[#allocation0]]
  $region26: #{_sqrel_unweighted_impl.1} parent=0
    _
  %s5 = ssub.s32 1, %s3
  %s6 = scalar_select 0, %s5, %s3
  // Predicated region
  $region2: #{_sqrel_unweighted_impl.1} parent=0 // pred_check
    _
  $region3: #{_sqrel_unweighted_impl.1} parent=0 // pred_check_branch
    %8 = sbr.rel (0) target = $region5
  $region4: #{_sqrel_unweighted_impl.1} parent=0 // pred_region
    %s9 = sadd.s32 0, 0
    %p10 = scmp.lt.s32.totalorder %s9, 0
    %s11 = scalar_select %p10, %s9, 0
    %s12 = smul.addr %s11, 4
    %s13 = smul.addr %s12, 4
    %s14 = scalar_lea.vmem %s0, %s13
    %s15 = sadd.s32 0, 0
  $region5: #{_sqrel_unweighted_impl.1} parent=0 // pred_fallthru
    _
  // Predicated region
  $region6: #{_sqrel_unweighted_impl.1} parent=0 // pred_check
    _
  $region7: #{_sqrel_unweighted_impl.1} parent=0 // pred_check_branch
    %17 = sbr.rel (0) target = $region9
  $region8: #{_sqrel_unweighted_impl.1} parent=0 // pred_region
    %s18 = sadd.s32 0, 0
    %p19 = scmp.lt.s32.totalorder %s18, 0
    %s20 = scalar_select %p19, %s18, 0
    %s21 = smul.addr %s20, 4
    %s22 = smul.addr %s21, 4
    %s23 = scalar_lea.vmem %s1, %s22
    %s24 = sadd.s32 0, 0
  $region9: #{_sqrel_unweighted_impl.1} parent=0 // pred_fallthru
    _
  %s25 = sadd.s32 0, 0
  %p26 = scmp.lt.s32.totalorder %s25, 0
  %s27 = scalar_select %p26, %s25, 0
  %s28 = smul.addr %s27, 4
  %s29 = smul.addr %s28, 4
  %s30 = scalar_lea.vmem %s0, %s29
  %s31 = sadd.s32 0, 0
  %p32 = scmp.lt.s32.totalorder %s31, 0
  %s33 = scalar_select %p32, %s31, 0
  %s34 = smul.addr %s33, 4
  %s35 = smul.addr %s34, 4
  %s36 = scalar_lea.vmem %s1, %s35
  %s37 = sadd.s32 0, 0
  %p38 = scmp.lt.s32.totalorder %s37, 0
  %s39 = scalar_select %p38, %s37, 0
  %s40 = smul.addr %s39, 4
  %s41 = smul.addr %s40, 4
  %s42 = scalar_lea.vmem %s0, %s41
  %s43 = sadd.s32 0, 0
  %s44 = sadd.s32 0, 0
  %p45 = scmp.lt.s32.totalorder %s44, 0
  %s46 = scalar_select %p45, %s44, 0
  %s47 = smul.addr %s46, 4
  %s48 = smul.addr %s47, 4
  %s49 = scalar_lea.vmem %s1, %s48
  %s50 = sadd.s32 0, 0
  %p51 = scmp.eq.s32.totalorder 0, 0
  // Predicated region
  $region10: #{_sqrel_unweighted_impl.1} parent=0 // pred_check
    %p52 = pneg %p51
  $region11: #{_sqrel_unweighted_impl.1} parent=0 // pred_check_branch
    %54 = sbr.rel (%p52) target = $region13
  $region12: #{_sqrel_unweighted_impl.1} parent=0 // pred_region
    %55 = vst [vmem:[#allocation2] sm:$0xff] 0.0
    %56 = vst [vmem:[#allocation2 + $0x8] sm:$0xff] 0.0
  $region13: #{_sqrel_unweighted_impl.1} parent=0 // pred_fallthru
    _
  %v57 = vld [vmem:[%s42] sm:$0xff]
  %v58 = vld [vmem:[%s42 + $0x8] sm:$0xff]
  %v59 = vld [vmem:[%s49] sm:$0xff]
  %v60 = vld [vmem:[%s49 + $0x8] sm:$0xff]
  %v61 = vrcp.pop %v57
  %v62 = vrcp.pop %v58
  %v63 = vmul.f32 %v57, %v61
  %v64 = vmul.f32 %v58, %v62
  %v65 = vsub.f32 2.0, %v63
  %v66 = vsub.f32 2.0, %v64
  %v67 = vmul.f32 %v61, %v65
  %v68 = vmul.f32 %v62, %v66
  %v69 = vsub.f32 %v57, %v59
  %v70 = vsub.f32 %v58, %v60
  %v71 = vmul.f32 %v69, %v69
  %v72 = vmul.f32 %v70, %v70
  %v73 = vmul.f32 %v71, %v67
  %v74 = vmul.f32 %v72, %v68
  %v75 = vld [vmem:[#allocation2] sm:$0xff]
  %v76 = vld [vmem:[#allocation2 + $0x8] sm:$0xff]
  %v77 = vadd.f32 %v75, %v73
  %v78 = vadd.f32 %v76, %v74
  %79 = vst [vmem:[#allocation2] sm:$0xff] %v77
  %80 = vst [vmem:[#allocation2 + $0x8] sm:$0xff] %v78
  // Predicated region
  $region14: #{_sqrel_unweighted_impl.1} parent=0 // pred_check
    %p81 = pneg %p51
  $region15: #{_sqrel_unweighted_impl.1} parent=0 // pred_check_branch
    %83 = sbr.rel (%p81) target = $region17
  $region16: #{_sqrel_unweighted_impl.1} parent=0 // pred_region
    %v84 = vld [vmem:[#allocation2] sm:$0xff]
    %v85 = vld [vmem:[#allocation2 + $0x8] sm:$0xff]
    %88 = vst [vmem:[#allocation1] ss:$2 sm:$0xff] %v84
    %s89 = scalar_lea.vmem [#allocation1], 16
    %90 = vst [vmem:[%s89] ss:$2 sm:$0xff] %v85
    %v91 = vld.sshfl [vmem:[#allocation1] sm:$0xff pattern:$0x75316420]
    %v92 = vld.sshfl [vmem:[#allocation1 + $0x8] sm:$0xff pattern:$0x75316420]
    %v93 = vld.sshfl [vmem:[#allocation1 + $0x10] sm:$0xff pattern:$0x75316420]
    %v94 = vld.sshfl [vmem:[#allocation1 + $0x18] sm:$0xff pattern:$0x75316420]
    %vm99 = vcmask 1043456
    %v100 = vsel %vm99, %v91, 0.0
    %v101 = vrot.slane %v100, 4
    %v102 = vadd.f32 %v100, %v101
    %v103 = vrot.slane %v102, 2
    %v104 = vadd.f32 %v102, %v103
    %v105 = vrot.slane %v104, 1
    %v106 = vadd.f32 %v104, %v105
    %v107 = vsel %vm99, %v92, 0.0
    %v108 = vrot.slane %v107, 4
    %v109 = vadd.f32 %v107, %v108
    %v110 = vrot.slane %v109, 2
    %v111 = vadd.f32 %v109, %v110
    %v112 = vrot.slane %v111, 1
    %v113 = vadd.f32 %v111, %v112
    %v114 = vsel %vm99, %v93, 0.0
    %v115 = vrot.slane %v114, 4
    %v116 = vadd.f32 %v114, %v115
    %v117 = vrot.slane %v116, 2
    %v118 = vadd.f32 %v116, %v117
    %v119 = vrot.slane %v118, 1
    %v120 = vadd.f32 %v118, %v119
    %v121 = vsel %vm99, %v94, 0.0
    %v122 = vrot.slane %v121, 4
    %v123 = vadd.f32 %v121, %v122
    %v124 = vrot.slane %v123, 2
    %v125 = vadd.f32 %v123, %v124
    %v126 = vrot.slane %v125, 1
    %v127 = vadd.f32 %v125, %v126
    %v132 = vrot.slane %v113, 7
    %v133 = vrot.slane %v120, 6
    %v134 = vrot.slane %v127, 5
    %vm135 = vcmask 1040384
    %v136 = vsel %vm135, %v106, %v132
    %vm137 = vcmask 1042434
    %v138 = vsel %vm137, %v133, %v134
    %vm139 = vcmask 1041408
    %v140 = vsel %vm139, %v136, %v138
    %v142 = vlaneseq
    %vm143 = vcmp.ge.s32.totalorder %v142, 0
    %vm144 = vcmp.lt.s32.totalorder %v142, 512
    %vm145 = vmand %vm143, %vm144
    %146 = vst.msk [vmem:[%s2] sm:$0xf] %vm145, %v140
  $region17: #{_sqrel_unweighted_impl.1} parent=0 // pred_fallthru
    _
  // Predicated region
  $region18: #{_sqrel_unweighted_impl.1} parent=0 // pred_check
    _
  $region19: #{_sqrel_unweighted_impl.1} parent=0 // pred_check_branch
    %148 = sbr.rel (0) target = $region21
  $region20: #{_sqrel_unweighted_impl.1} parent=0 // pred_region
    _
  $region21: #{_sqrel_unweighted_impl.1} parent=0 // pred_fallthru
    _
  // Predicated region
  $region22: #{_sqrel_unweighted_impl.1} parent=0 // pred_check
    _
  $region23: #{_sqrel_unweighted_impl.1} parent=0 // pred_check_branch
    %150 = sbr.rel (0) target = $region25
  $region24: #{_sqrel_unweighted_impl.1} parent=0 // pred_region
    _
  $region25: #{_sqrel_unweighted_impl.1} parent=0 // pred_fallthru
    _

</llo_original>
